<compile_context>
chip_gen: v5e
topology: v5e:2x2
jax: 0.10.0
libtpu: 0.0.40
codegen_flags: <defaults>
</compile_context>

<pallas_src>
import jax
import jax.numpy as jnp
from jax import lax
from jax.experimental import pallas as pl
from jax.experimental.pallas import tpu as pltpu

SUB = 8      # sublane multiple
LANE = 128   # lane multiple


def _round_up(x, m):
    return ((x + m - 1) // m) * m


def _sigmoid_via_tanh(x):
    # sigmoid(x) = 0.5 * (1 + tanh(0.5 x)): one EUP push instead of exp + recip.
    return 0.5 * (jnp.tanh(0.5 * x) + 1.0)


def _lstm_kernel(nsteps_ref, lens_ref, x_ref, wih_ref, whh_ref, b_ref,
                 out_ref, final_ref,
                 gx_ref, h_ref, c_ref):
    """One (batch-block, time-block) grid step of the masked LSTM recurrence.

    Shapes (padded, time-major):
      nsteps_ref: (n_bblk, n_tblk) int32 SMEM (scalar prefetch)  active steps/block
      lens_ref  : (B, 1)          int32
      x_ref     : (T_BLK, B, D)   bf16
      wih_ref   : (D, 4H)         bf16   (pre-transposed, single-buffered)
      whh_ref   : (H, 4H)         bf16   (pre-transposed, single-buffered)
      b_ref     : (1, 4H)         f32    (combined bias, single-buffered)
      out_ref   : (T_BLK, B, H)   bf16
      final_ref : (B, 2H)         f32
      gx_ref    : (T_BLK, B, 4H)  bf16 scratch (input projection)
      h_ref/c_ref : (B, H)        f32 scratch, persistent across time blocks
    """
    bb = pl.program_id(0)
    tb = pl.program_id(1)
    n_tblk = pl.num_programs(1)

    T_BLK, B, D = x_ref.shape
    H4 = wih_ref.shape[1]
    H = H4 // 4

    ns = nsteps_ref[bb, tb]            # number of active steps in this block

    @pl.when(tb == 0)
    def _init():
        h_ref[...] = jnp.zeros_like(h_ref)
        c_ref[...] = jnp.zeros_like(c_ref)

    # Steps past every sequence in the block produce zeros (pad_packed_sequence
    # semantics); only pay the zero-fill when some steps are actually skipped.
    @pl.when(ns < T_BLK)
    def _zero_tail():
        out_ref[...] = jnp.zeros_like(out_ref)

    @pl.when(ns > 0)
    def _compute():
        # Input projection for the whole time block as a single large-M MXU
        # matmul (bf16 in, f32 accumulation); bias folded once, stored bf16.
        x_blk = x_ref[...].reshape(T_BLK * B, D)
        gx = jnp.dot(x_blk, wih_ref[...], preferred_element_type=jnp.float32)
        gx = gx + b_ref[...]
        gx_ref[...] = gx.reshape(T_BLK, B, H4).astype(gx_ref.dtype)

        lens = lens_ref[...]                       # (B, 1) int32
        t_base = tb * T_BLK

        # TODO(synk): weight-stationary W_hh (pltpu.matmul_push_rhs /
        #             matmul_acc_lhs / matmul_pop) would avoid re-staging the
        #             (H,4H) RHS on every serial step.
        @pl.loop(0, ns)
        def _step(t):
            h = h_ref[...]                                         # (B, H) f32
            c = c_ref[...]
            g = gx_ref[t].astype(jnp.float32) + jnp.dot(
                h.astype(whh_ref.dtype), whh_ref[...],
                preferred_element_type=jnp.float32)

            i_g = _sigmoid_via_tanh(g[:, 0 * H:1 * H])
            f_g = _sigmoid_via_tanh(g[:, 1 * H:2 * H])
            g_g = jnp.tanh(g[:, 2 * H:3 * H])
            o_g = _sigmoid_via_tanh(g[:, 3 * H:4 * H])

            c_new = f_g * c + i_g * g_g
            h_new = o_g * jnp.tanh(c_new)

            # materialize the (B,1)->(B,H) mask broadcast once, reuse everywhere
            m = jnp.broadcast_to((t_base + t) < lens, h_new.shape)
            h_ref[...] = jnp.where(m, h_new, h)                    # hold past len
            c_ref[...] = jnp.where(m, c_new, c)
            out_ref[t] = jnp.where(m, h_new, 0.0).astype(out_ref.dtype)

    @pl.when(tb == n_tblk - 1)
    def _finalize():
        # final hidden = cat((h_n, c_n), -1).transpose(0,1).reshape(B, -1)
        final_ref[:, 0:H] = h_ref[...].astype(final_ref.dtype)
        final_ref[:, H:2 * H] = c_ref[...].astype(final_ref.dtype)


def rnn_forward(x, attention_mask, w_ih, w_hh, b_ih, b_hh,
                *, t_block=128, b_block=128):
    """x: (B, T, D) f32, attention_mask: (B, T) (left-aligned 1s then 0s)."""
    B, T, D = x.shape
    H = w_hh.shape[1]
    assert w_ih.shape == (4 * H, D) and w_hh.shape == (4 * H, H)

    H_pad = _round_up(H, LANE)
    D_pad = _round_up(D, LANE)
    H4p = 4 * H_pad

    # ---- batch blocking: pad B up to a block-friendly size (padded rows are
    #      masked, and fully-padded blocks are skipped via nsteps==0) ----
    B_pad = _round_up(B, SUB)
    if B_pad <= b_block:
        b_blk = B_pad
        # TODO(synk): on v7x, split into 2 batch blocks when B_pad is large enough
        #             so the "parallel" axis can occupy both TensorCores.
    else:
        b_blk = b_block
        B_pad = _round_up(B_pad, b_blk)
    n_bblk = B_pad // b_blk

    # ---- per-generation VMEM budget (leave headroom for Mosaic scratch) ----
    try:
        info = pltpu.get_tpu_info()
        vmem_cap = int(getattr(info, "vmem_capacity_bytes", 64 * 2**20))
    except Exception:
        vmem_cap = 64 * 2**20
    vmem_budget = int(vmem_cap * 0.8)

    # ---- time blocking: keep T_pad tight, then shrink to fit the VMEM budget ----
    n_t = max(1, -(-T // t_block))
    t_blk = max(SUB, _round_up(-(-T // n_t), SUB))

    def est_bytes(tb):
        return (2 * tb * b_blk * D_pad * 2          # x blocks (bf16, double-buffered)
                + 2 * tb * b_blk * H_pad * 2        # out blocks (bf16, double-buffered)
                + 2 * b_blk * 2 * H_pad * 4         # final block (f32)
                + (D_pad + H_pad) * H4p * 2         # weights (bf16, single-buffered)
                + H4p * 4 + 2 * b_blk * 4           # bias + lens
                + tb * b_blk * H4p * 2              # gx scratch (bf16)
                + 2 * b_blk * H_pad * 4)            # h/c state

    while est_bytes(t_blk) > vmem_budget and t_blk > SUB:
        t_blk = max(SUB, _round_up(t_blk // 2, SUB))

    T_pad = _round_up(T, t_blk)
    n_tblk = T_pad // t_blk

    # ---- host-side data prep (padding, time-major, bf16 weights) ----
    lens = attention_mask.astype(jnp.int32).sum(axis=-1)                 # (B,)
    lens_p = jnp.zeros((B_pad,), jnp.int32).at[:B].set(lens)
    lens_col = lens_p.reshape(B_pad, 1)

    # per-(batch-block, time-block) active-step counts (scalar prefetch -> SMEM)
    max_len_blk = lens_p.reshape(n_bblk, b_blk).max(axis=1)              # (n_bblk,)
    t_starts = jnp.arange(n_tblk, dtype=jnp.int32) * t_blk
    nsteps = jnp.clip(max_len_blk[:, None] - t_starts[None, :],
                      0, t_blk).astype(jnp.int32)                        # (n_bblk, n_tblk)

    x_tm = jnp.swapaxes(x, 0, 1)                                         # (T, B, D)
    x_p = jnp.zeros((T_pad, B_pad, D_pad), jnp.bfloat16)
    x_p = x_p.at[:T, :B, :D].set(x_tm.astype(jnp.bfloat16))

    def pad_gates(w, in_dim, in_pad):
        # (4H, in_dim) -> (in_pad, 4*H_pad): zero-pad each gate block, transpose.
        w4 = w.reshape(4, H, in_dim)
        w4p = jnp.zeros((4, H_pad, in_pad), w.dtype).at[:, :H, :in_dim].set(w4)
        return jnp.transpose(w4p.reshape(4 * H_pad, in_pad))

    wih_t = pad_gates(w_ih, D, D_pad).astype(jnp.bfloat16)               # (D_pad, 4H_pad)
    whh_t = pad_gates(w_hh, H, H_pad).astype(jnp.bfloat16)               # (H_pad, 4H_pad)

    b4 = (b_ih + b_hh).reshape(4, H)
    bias = jnp.zeros((4, H_pad), jnp.float32).at[:, :H].set(b4).reshape(1, H4p)

    grid = (n_bblk, n_tblk)

    in_specs = [
        pl.BlockSpec((b_blk, 1), lambda b, t, ns: (b, 0)),               # lens
        pl.BlockSpec((t_blk, b_blk, D_pad), lambda b, t, ns: (t, b, 0)), # x (time-major)
        pl.BlockSpec((D_pad, H4p), lambda b, t, ns: (0, 0),              # w_ih^T (pinned)
                     pipeline_mode=pl.Buffered(1)),
        pl.BlockSpec((H_pad, H4p), lambda b, t, ns: (0, 0),              # w_hh^T (pinned)
                     pipeline_mode=pl.Buffered(1)),
        pl.BlockSpec((1, H4p), lambda b, t, ns: (0, 0),                  # bias   (pinned)
                     pipeline_mode=pl.Buffered(1)),
    ]
    out_specs = (
        pl.BlockSpec((t_blk, b_blk, H_pad), lambda b, t, ns: (t, b, 0)), # per-token out
        pl.BlockSpec((b_blk, 2 * H_pad), lambda b, t, ns: (b, 0)),       # final (resident over t)
    )
    scratch_shapes = [
        pltpu.VMEM((t_blk, b_blk, H4p), jnp.bfloat16),   # gx (input projection)
        pltpu.VMEM((b_blk, H_pad), jnp.float32),         # h state
        pltpu.VMEM((b_blk, H_pad), jnp.float32),         # c state
    ]

    out_p, final_p = pl.pallas_call(
        _lstm_kernel,
        out_shape=(
            jax.ShapeDtypeStruct((T_pad, B_pad, H_pad), jnp.bfloat16),
            jax.ShapeDtypeStruct((B_pad, 2 * H_pad), jnp.float32),
        ),
        grid_spec=pltpu.PrefetchScalarGridSpec(
            num_scalar_prefetch=1,
            grid=grid,
            in_specs=in_specs,
            out_specs=out_specs,
            scratch_shapes=scratch_shapes,
        ),
        compiler_params=pltpu.CompilerParams(
            dimension_semantics=("parallel", "arbitrary"),
            vmem_limit_bytes=vmem_budget,
        ),
    )(nsteps, lens_col, x_p, wih_t, whh_t, bias)

    # strip padding, restore batch-first layout, return in the input dtype
    out = jnp.swapaxes(out_p[:T, :B, :H], 0, 1).astype(x.dtype)          # (B, T, H)
    final = jnp.concatenate(
        [final_p[:B, :H], final_p[:B, H_pad:H_pad + H]], axis=-1)        # (B, 2H)
    return out, final


def lstm_reference(x, attention_mask, w_ih, w_hh, b_ih, b_hh):
    """Pure-JAX f32 reference mirroring packed-sequence LSTM semantics."""
    B, T, D = x.shape
    H = w_hh.shape[1]
    mask_f = attention_mask.astype(jnp.float32)

    def step(carry, inp):
        h, c = carry
        x_t, m_t = inp                                   # (B, D), (B,)
        g = x_t @ w_ih.T + h @ w_hh.T + b_ih + b_hh
        i_g = jax.nn.sigmoid(g[:, 0 * H:1 * H])
        f_g = jax.nn.sigmoid(g[:, 1 * H:2 * H])
        g_g = jnp.tanh(g[:, 2 * H:3 * H])
        o_g = jax.nn.sigmoid(g[:, 3 * H:4 * H])
        c_new = f_g * c + i_g * g_g
        h_new = o_g * jnp.tanh(c_new)
        m = m_t[:, None]
        h_next = m * h_new + (1.0 - m) * h
        c_next = m * c_new + (1.0 - m) * c
        return (h_next, c_next), m * h_new

    (hT, cT), outs = lax.scan(
        step,
        (jnp.zeros((B, H), jnp.float32), jnp.zeros((B, H), jnp.float32)),
        (jnp.swapaxes(x, 0, 1), jnp.swapaxes(mask_f, 0, 1)),
    )
    out = jnp.swapaxes(outs, 0, 1)
    final = jnp.concatenate([hT, cT], axis=-1)
    return out, final


if __name__ == "__main__":
    B, T, D, H = 2, 8, 16, 32

    key = jax.random.PRNGKey(0)
    k_x, k1, k2, k3, k4 = jax.random.split(key, 5)

    x = jax.random.normal(k_x, (B, T, D), dtype=jnp.float32)

    # left-aligned attention mask; at least one full-length sequence so that
    # pad_packed_sequence's max-length output equals T.
    lens = jnp.array([T, 5], dtype=jnp.int32)
    attention_mask = (jnp.arange(T)[None, :] < lens[:, None]).astype(jnp.int32)

    # PyTorch LSTM init: U(-1/sqrt(H), 1/sqrt(H)), gate order [i, f, g, o].
    bound = 1.0 / (H ** 0.5)
    w_ih = jax.random.uniform(k1, (4 * H, D), jnp.float32, -bound, bound)
    w_hh = jax.random.uniform(k2, (4 * H, H), jnp.float32, -bound, bound)
    b_ih = jax.random.uniform(k3, (4 * H,), jnp.float32, -bound, bound)
    b_hh = jax.random.uniform(k4, (4 * H,), jnp.float32, -bound, bound)

    out, final = jax.jit(rnn_forward)(x, attention_mask, w_ih, w_hh, b_ih, b_hh)
    jax.block_until_ready((out, final))

    out_ref, final_ref = lstm_reference(x, attention_mask, w_ih, w_hh, b_ih, b_hh)
    assert out.shape == (B, T, H) and final.shape == (B, 2 * H)
    # bf16 MXU inputs / bf16 gx + output -> tolerance loosened vs the f32 reference.
    assert jnp.allclose(out, out_ref, atol=3e-2, rtol=3e-2)
    assert jnp.allclose(final, final_ref, atol=3e-2, rtol=3e-2)

    print("KERNEL_OK")
</pallas_src>

<mosaic_0001>
module attributes {stable_mosaic.version = 11 : i64} {
  func.func @_lstm_kernel(%arg0: i32, %arg1: i32, %arg2: memref<1x1xi32, #tpu.memory_space<smem>>, %arg3: memref<8x1xi32, #tpu.memory_space<vmem>>, %arg4: memref<8x8x128xbf16, #tpu.memory_space<vmem>>, %arg5: memref<128x512xbf16, #tpu.memory_space<vmem>>, %arg6: memref<128x512xbf16, #tpu.memory_space<vmem>>, %arg7: memref<1x512xf32, #tpu.memory_space<vmem>>, %arg8: memref<8x8x128xbf16, #tpu.memory_space<vmem>>, %arg9: memref<8x256xf32, #tpu.memory_space<vmem>>, %arg10: memref<8x8x512xbf16, #tpu.memory_space<vmem>>, %arg11: memref<8x128xf32, #tpu.memory_space<vmem>>, %arg12: memref<8x128xf32, #tpu.memory_space<vmem>>) attributes {dimension_semantics = [#tpu.dimension_semantics<parallel>, #tpu.dimension_semantics<arbitrary>], iteration_bounds = array<i64: 1, 1>, scalar_prefetch = 1 : i64, scratch_operands = 3 : i64, tpu.core_type = #tpu.core_type<tc>, window_params = [{transform_indices = @transform_0, window_bounds = array<i64: 8, 1>}, {transform_indices = @transform_1, window_bounds = array<i64: 8, 8, 128>}, {pipeline_mode = #tpu.pipeline_mode<synchronous>, transform_indices = @transform_2, window_bounds = array<i64: 128, 512>}, {pipeline_mode = #tpu.pipeline_mode<synchronous>, transform_indices = @transform_3, window_bounds = array<i64: 128, 512>}, {pipeline_mode = #tpu.pipeline_mode<synchronous>, transform_indices = @transform_4, window_bounds = array<i64: 1, 512>}, {transform_indices = @transform_5, window_bounds = array<i64: 8, 8, 128>}, {transform_indices = @transform_6, window_bounds = array<i64: 8, 256>}]} {
    %0 = arith.index_cast %arg0 : i32 to index
    %1 = arith.index_cast %arg1 : i32 to index
    %2 = memref.load %arg2[%0, %1] : memref<1x1xi32, #tpu.memory_space<smem>>
    %c0_i32 = arith.constant 0 : i32
    %3 = arith.cmpi eq, %arg1, %c0_i32 : i32
    %4 = arith.extui %3 : i1 to i32
    %c0_i32_0 = arith.constant 0 : i32
    %5 = arith.cmpi ne, %4, %c0_i32_0 : i32
    scf.if %5 {
      %cst = arith.constant 0.000000e+00 : f32
      %15 = vector.broadcast %cst : f32 to vector<8x128xf32>
      %c0 = arith.constant 0 : index
      %c0_6 = arith.constant 0 : index
      %16 = vector.load %arg11[%c0, %c0_6] : memref<8x128xf32, #tpu.memory_space<vmem>>, vector<8x128xf32>
      tpu.vector_store %arg11[%c0, %c0_6], %15 {strides = array<i32>} : memref<8x128xf32, #tpu.memory_space<vmem>>, vector<8x128xf32>,
      %cst_7 = arith.constant 0.000000e+00 : f32
      %17 = vector.broadcast %cst_7 : f32 to vector<8x128xf32>
      %c0_8 = arith.constant 0 : index
      %c0_9 = arith.constant 0 : index
      %18 = vector.load %arg12[%c0_8, %c0_9] : memref<8x128xf32, #tpu.memory_space<vmem>>, vector<8x128xf32>
      tpu.vector_store %arg12[%c0_8, %c0_9], %17 {strides = array<i32>} : memref<8x128xf32, #tpu.memory_space<vmem>>, vector<8x128xf32>,
    } else {
    }
    %c8_i32 = arith.constant 8 : i32
    %6 = arith.cmpi slt, %2, %c8_i32 : i32
    %7 = arith.extui %6 : i1 to i32
    %c0_i32_1 = arith.constant 0 : i32
    %8 = arith.cmpi ne, %7, %c0_i32_1 : i32
    scf.if %8 {
      %cst = arith.constant 0.000000e+00 : bf16
      %15 = vector.broadcast %cst : bf16 to vector<8x8x128xbf16>
      %c0 = arith.constant 0 : index
      %c0_6 = arith.constant 0 : index
      %c0_7 = arith.constant 0 : index
      %16 = vector.load %arg8[%c0, %c0_6, %c0_7] : memref<8x8x128xbf16, #tpu.memory_space<vmem>>, vector<8x8x128xbf16>
      tpu.vector_store %arg8[%c0, %c0_6, %c0_7], %15 {strides = array<i32>} : memref<8x8x128xbf16, #tpu.memory_space<vmem>>, vector<8x8x128xbf16>,
    } else {
    }
    %c0_i32_2 = arith.constant 0 : i32
    %9 = arith.cmpi sgt, %2, %c0_i32_2 : i32
    %10 = arith.extui %9 : i1 to i32
    %c0_i32_3 = arith.constant 0 : i32
    %11 = arith.cmpi ne, %10, %c0_i32_3 : i32
    scf.if %11 {
      %c0 = arith.constant 0 : index
      %c0_6 = arith.constant 0 : index
      %c0_7 = arith.constant 0 : index
      %15 = vector.load %arg4[%c0, %c0_6, %c0_7] : memref<8x8x128xbf16, #tpu.memory_space<vmem>>, vector<8x8x128xbf16>
      %16 = vector.shape_cast %15 : vector<8x8x128xbf16> to vector<64x128xbf16>
      %c0_8 = arith.constant 0 : index
      %c0_9 = arith.constant 0 : index
      %17 = vector.load %arg5[%c0_8, %c0_9] : memref<128x512xbf16, #tpu.memory_space<vmem>>, vector<128x512xbf16>
      %cst = arith.constant dense<0.000000e+00> : vector<64x512xf32>
      %18 = tpu.matmul %16, %17, %cst {dimension_numbers = #tpu.dot_dimension_numbers<[1], [0], [0], [1], [0, 0, 1, 1], [], []>} : vector<64x128xbf16>, vector<128x512xbf16>, vector<64x512xf32> -> vector<64x512xf32>
      %c0_10 = arith.constant 0 : index
      %c0_11 = arith.constant 0 : index
      %19 = vector.load %arg7[%c0_10, %c0_11] : memref<1x512xf32, #tpu.memory_space<vmem>>, vector<1x512xf32>
      %20 = vector.broadcast %19 : vector<1x512xf32> to vector<64x512xf32>
      %21 = arith.addf %18, %20 : vector<64x512xf32>
      %22 = vector.shape_cast %21 : vector<64x512xf32> to vector<8x8x512xf32>
      %23 = arith.truncf %22 : vector<8x8x512xf32> to vector<8x8x512xbf16>
      %c0_12 = arith.constant 0 : index
      %c0_13 = arith.constant 0 : index
      %c0_14 = arith.constant 0 : index
      %24 = vector.load %arg10[%c0_12, %c0_13, %c0_14] : memref<8x8x512xbf16, #tpu.memory_space<vmem>>, vector<8x8x512xbf16>
      tpu.vector_store %arg10[%c0_12, %c0_13, %c0_14], %23 {strides = array<i32>} : memref<8x8x512xbf16, #tpu.memory_space<vmem>>, vector<8x8x512xbf16>,
      %c0_15 = arith.constant 0 : index
      %c0_16 = arith.constant 0 : index
      %25 = vector.load %arg3[%c0_15, %c0_16] : memref<8x1xi32, #tpu.memory_space<vmem>>, vector<8x1xi32>
      %c8_i32_17 = arith.constant 8 : i32
      %26 = arith.muli %arg1, %c8_i32_17 : i32
      %c0_i32_18 = arith.constant 0 : i32
      %27 = arith.subi %2, %c0_i32_18 : i32
      %c1_i32 = arith.constant 1 : i32
      %c1_i32_19 = arith.constant 1 : i32
      %28 = arith.subi %c1_i32, %c1_i32_19 : i32
      %29 = arith.addi %27, %28 : i32
      %c1_i32_20 = arith.constant 1 : i32
      %30 = arith.divsi %29, %c1_i32_20 : i32
      %c1_i32_21 = arith.constant 1 : i32
      %c0_i32_22 = arith.constant 0 : i32
      %c0_i32_23 = arith.constant 0 : i32
      %31 = arith.subi %30, %c0_i32_23 : i32
      %32 = arith.addi %c0_i32_23, %31 : i32
      %c1_i32_24 = arith.constant 1 : i32
      scf.for %arg13 = %c0_i32_23 to %32 step %c1_i32_24  : i32 {
        %33 = arith.muli %arg13, %c1_i32_21 : i32
        %34 = arith.addi %c0_i32_22, %33 : i32
        %c0_25 = arith.constant 0 : index
        %c0_26 = arith.constant 0 : index
        %35 = vector.load %arg11[%c0_25, %c0_26] : memref<8x128xf32, #tpu.memory_space<vmem>>, vector<8x128xf32>
        %c0_27 = arith.constant 0 : index
        %c0_28 = arith.constant 0 : index
        %36 = vector.load %arg12[%c0_27, %c0_28] : memref<8x128xf32, #tpu.memory_space<vmem>>, vector<8x128xf32>
        %37 = arith.index_cast %34 : i32 to index
        %c0_29 = arith.constant 0 : index
        %c0_30 = arith.constant 0 : index
        %38 = vector.load %arg10[%37, %c0_29, %c0_30] : memref<8x8x512xbf16, #tpu.memory_space<vmem>>, vector<1x8x512xbf16>
        %39 = vector.shape_cast %38 : vector<1x8x512xbf16> to vector<8x512xbf16>
        %40 = arith.extf %39 : vector<8x512xbf16> to vector<8x512xf32>
        %41 = arith.truncf %35 : vector<8x128xf32> to vector<8x128xbf16>
        %c0_31 = arith.constant 0 : index
        %c0_32 = arith.constant 0 : index
        %42 = vector.load %arg6[%c0_31, %c0_32] : memref<128x512xbf16, #tpu.memory_space<vmem>>, vector<128x512xbf16>
        %cst_33 = arith.constant dense<0.000000e+00> : vector<8x512xf32>
        %43 = tpu.matmul %41, %42, %cst_33 {dimension_numbers = #tpu.dot_dimension_numbers<[1], [0], [0], [1], [0, 0, 1, 1], [], []>} : vector<8x128xbf16>, vector<128x512xbf16>, vector<8x512xf32> -> vector<8x512xf32>
        %44 = arith.addf %40, %43 : vector<8x512xf32>
        %45 = vector.extract_strided_slice %44 {offsets = [0, 0], sizes = [8, 128], strides = [1, 1]} : vector<8x512xf32> to vector<8x128xf32>
        %cst_34 = arith.constant 5.000000e-01 : f32
        %46 = vector.broadcast %cst_34 : f32 to vector<8x128xf32>
        %47 = arith.mulf %46, %45 : vector<8x128xf32>
        %48 = math.tanh %47 : vector<8x128xf32>
        %cst_35 = arith.constant 1.000000e+00 : f32
        %49 = vector.broadcast %cst_35 : f32 to vector<8x128xf32>
        %50 = arith.addf %48, %49 : vector<8x128xf32>
        %cst_36 = arith.constant 5.000000e-01 : f32
        %51 = vector.broadcast %cst_36 : f32 to vector<8x128xf32>
        %52 = arith.mulf %51, %50 : vector<8x128xf32>
        %53 = vector.extract_strided_slice %44 {offsets = [0, 128], sizes = [8, 128], strides = [1, 1]} : vector<8x512xf32> to vector<8x128xf32>
        %cst_37 = arith.constant 5.000000e-01 : f32
        %54 = vector.broadcast %cst_37 : f32 to vector<8x128xf32>
        %55 = arith.mulf %54, %53 : vector<8x128xf32>
        %56 = math.tanh %55 : vector<8x128xf32>
        %cst_38 = arith.constant 1.000000e+00 : f32
        %57 = vector.broadcast %cst_38 : f32 to vector<8x128xf32>
        %58 = arith.addf %56, %57 : vector<8x128xf32>
        %cst_39 = arith.constant 5.000000e-01 : f32
        %59 = vector.broadcast %cst_39 : f32 to vector<8x128xf32>
        %60 = arith.mulf %59, %58 : vector<8x128xf32>
        %61 = vector.extract_strided_slice %44 {offsets = [0, 256], sizes = [8, 128], strides = [1, 1]} : vector<8x512xf32> to vector<8x128xf32>
        %62 = math.tanh %61 : vector<8x128xf32>
        %63 = vector.extract_strided_slice %44 {offsets = [0, 384], sizes = [8, 128], strides = [1, 1]} : vector<8x512xf32> to vector<8x128xf32>
        %cst_40 = arith.constant 5.000000e-01 : f32
        %64 = vector.broadcast %cst_40 : f32 to vector<8x128xf32>
        %65 = arith.mulf %64, %63 : vector<8x128xf32>
        %66 = math.tanh %65 : vector<8x128xf32>
        %cst_41 = arith.constant 1.000000e+00 : f32
        %67 = vector.broadcast %cst_41 : f32 to vector<8x128xf32>
        %68 = arith.addf %66, %67 : vector<8x128xf32>
        %cst_42 = arith.constant 5.000000e-01 : f32
        %69 = vector.broadcast %cst_42 : f32 to vector<8x128xf32>
        %70 = arith.mulf %69, %68 : vector<8x128xf32>
        %71 = arith.mulf %60, %36 : vector<8x128xf32>
        %72 = arith.mulf %52, %62 : vector<8x128xf32>
        %73 = arith.addf %71, %72 : vector<8x128xf32>
        %74 = math.tanh %73 : vector<8x128xf32>
        %75 = arith.mulf %70, %74 : vector<8x128xf32>
        %76 = arith.addi %26, %34 : i32
        %77 = vector.broadcast %76 : i32 to vector<8x1xi32>
        %78 = arith.cmpi slt, %77, %25 : vector<8x1xi32>
        %79 = vector.shape_cast %78 : vector<8x1xi1> to vector<8x1xi1>
        %80 = vector.broadcast %79 : vector<8x1xi1> to vector<8x128xi1>
        %81 = arith.select %80, %75, %35 : vector<8x128xi1>, vector<8x128xf32>
        %c0_43 = arith.constant 0 : index
        %c0_44 = arith.constant 0 : index
        %82 = vector.load %arg11[%c0_43, %c0_44] : memref<8x128xf32, #tpu.memory_space<vmem>>, vector<8x128xf32>
        tpu.vector_store %arg11[%c0_43, %c0_44], %81 {strides = array<i32>} : memref<8x128xf32, #tpu.memory_space<vmem>>, vector<8x128xf32>,
        %83 = arith.select %80, %73, %36 : vector<8x128xi1>, vector<8x128xf32>
        %c0_45 = arith.constant 0 : index
        %c0_46 = arith.constant 0 : index
        %84 = vector.load %arg12[%c0_45, %c0_46] : memref<8x128xf32, #tpu.memory_space<vmem>>, vector<8x128xf32>
        tpu.vector_store %arg12[%c0_45, %c0_46], %83 {strides = array<i32>} : memref<8x128xf32, #tpu.memory_space<vmem>>, vector<8x128xf32>,
        %cst_47 = arith.constant 0.000000e+00 : f32
        %85 = vector.broadcast %cst_47 : f32 to vector<8x128xf32>
        %86 = arith.select %80, %75, %85 : vector<8x128xi1>, vector<8x128xf32>
        %87 = arith.truncf %86 : vector<8x128xf32> to vector<8x128xbf16>
        %88 = arith.index_cast %34 : i32 to index
        %c0_48 = arith.constant 0 : index
        %c0_49 = arith.constant 0 : index
        %89 = vector.load %arg8[%88, %c0_48, %c0_49] : memref<8x8x128xbf16, #tpu.memory_space<vmem>>, vector<1x8x128xbf16>
        %90 = vector.shape_cast %89 : vector<1x8x128xbf16> to vector<8x128xbf16>
        %91 = vector.shape_cast %87 : vector<8x128xbf16> to vector<1x8x128xbf16>
        tpu.vector_store %arg8[%88, %c0_48, %c0_49], %91 {strides = array<i32>} : memref<8x8x128xbf16, #tpu.memory_space<vmem>>, vector<1x8x128xbf16>,
      }
    } else {
    }
    %c0_i32_4 = arith.constant 0 : i32
    %12 = arith.cmpi eq, %arg1, %c0_i32_4 : i32
    %13 = arith.extui %12 : i1 to i32
    %c0_i32_5 = arith.constant 0 : i32
    %14 = arith.cmpi ne, %13, %c0_i32_5 : i32
    scf.if %14 {
      %c0 = arith.constant 0 : index
      %c0_6 = arith.constant 0 : index
      %15 = vector.load %arg11[%c0, %c0_6] : memref<8x128xf32, #tpu.memory_space<vmem>>, vector<8x128xf32>
      %c0_7 = arith.constant 0 : index
      %c0_8 = arith.constant 0 : index
      %16 = vector.load %arg9[%c0_7, %c0_8] : memref<8x256xf32, #tpu.memory_space<vmem>>, vector<8x128xf32>
      tpu.vector_store %arg9[%c0_7, %c0_8], %15 {strides = array<i32>} : memref<8x256xf32, #tpu.memory_space<vmem>>, vector<8x128xf32>,
      %c0_9 = arith.constant 0 : index
      %c0_10 = arith.constant 0 : index
      %17 = vector.load %arg12[%c0_9, %c0_10] : memref<8x128xf32, #tpu.memory_space<vmem>>, vector<8x128xf32>
      %c0_11 = arith.constant 0 : index
      %c128 = arith.constant 128 : index
      %18 = vector.load %arg9[%c0_11, %c128] : memref<8x256xf32, #tpu.memory_space<vmem>>, vector<8x128xf32>
      tpu.vector_store %arg9[%c0_11, %c128], %17 {strides = array<i32>} : memref<8x256xf32, #tpu.memory_space<vmem>>, vector<8x128xf32>,
    } else {
    }
    return
  }
  func.func @transform_0(%arg0: i32, %arg1: i32, %arg2: memref<1x1xi32, #tpu.memory_space<smem>>) -> (i32, i32) {
    %c0_i32 = arith.constant 0 : i32
    %c0_i32_0 = arith.constant 0 : i32
    return %arg0, %c0_i32 : i32, i32
  }
  func.func @transform_1(%arg0: i32, %arg1: i32, %arg2: memref<1x1xi32, #tpu.memory_space<smem>>) -> (i32, i32, i32) {
    %c0_i32 = arith.constant 0 : i32
    %c0_i32_0 = arith.constant 0 : i32
    return %arg1, %arg0, %c0_i32 : i32, i32, i32
  }
  func.func @transform_2(%arg0: i32, %arg1: i32, %arg2: memref<1x1xi32, #tpu.memory_space<smem>>) -> (i32, i32) {
    %c0_i32 = arith.constant 0 : i32
    %c0_i32_0 = arith.constant 0 : i32
    %c0_i32_1 = arith.constant 0 : i32
    return %c0_i32, %c0_i32_0 : i32, i32
  }
  func.func @transform_3(%arg0: i32, %arg1: i32, %arg2: memref<1x1xi32, #tpu.memory_space<smem>>) -> (i32, i32) {
    %c0_i32 = arith.constant 0 : i32
    %c0_i32_0 = arith.constant 0 : i32
    %c0_i32_1 = arith.constant 0 : i32
    return %c0_i32, %c0_i32_0 : i32, i32
  }
  func.func @transform_4(%arg0: i32, %arg1: i32, %arg2: memref<1x1xi32, #tpu.memory_space<smem>>) -> (i32, i32) {
    %c0_i32 = arith.constant 0 : i32
    %c0_i32_0 = arith.constant 0 : i32
    %c0_i32_1 = arith.constant 0 : i32
    return %c0_i32, %c0_i32_0 : i32, i32
  }
  func.func @transform_5(%arg0: i32, %arg1: i32, %arg2: memref<1x1xi32, #tpu.memory_space<smem>>) -> (i32, i32, i32) {
    %c0_i32 = arith.constant 0 : i32
    %c0_i32_0 = arith.constant 0 : i32
    return %arg1, %arg0, %c0_i32 : i32, i32, i32
  }
  func.func @transform_6(%arg0: i32, %arg1: i32, %arg2: memref<1x1xi32, #tpu.memory_space<smem>>) -> (i32, i32) {
    %c0_i32 = arith.constant 0 : i32
    %c0_i32_0 = arith.constant 0 : i32
    return %arg0, %c0_i32 : i32, i32
  }
}

</mosaic_0001>

<llo_original>
// kernel: rnn_forward.1
$region0: #{rnn_forward.1}
  #allocation0 [shape = 'u32[]', space=smem, size = 0x4, offset = 0x4, fixed_abs, tag = 'smem constant byte address 0x4 - core index']
  #allocation1 [shape = 'u32[72,128]{1,0:T(1,128)}', space=vmem, size = 0x9000, scoped, tag = 'internal scratch']
  #allocation2 [shape = 'bf16[8,8,512]{2,1,0:T(8,128)(2,1)}', space=vmem, size = 0x10000, scoped, tag = 'scratch operand']
  #allocation3 [shape = 'f32[8,128]{1,0:T(8,128)}', space=vmem, size = 0x1000, scoped, tag = 'scratch operand']
  #allocation4 [shape = 'f32[8,128]{1,0:T(8,128)}', space=vmem, size = 0x1000, scoped, tag = 'scratch operand']
  #allocation5 [shape = 's32[1]{0}', space=sflag, size = 0x4, scoped, tag = 'scoped memory for rnn_forward.1']
  #allocation6 [shape = 's32[1,1]{1,0:T(1,128)S(6)}', space=smem, size = 0x200, scoped, tag = 'prefetched SMEM operand 0']
  %s0 = inlined_call_operand.<no memory space> [shape: s32[1,1], index: 0, kind: input, shape index: {}]
  %s1 = inlined_call_operand.vmem [shape: s32[8,1], index: 1, kind: input, shape index: {}]
  %s2 = inlined_call_operand.vmem [shape: bf16[8,8,128], index: 2, kind: input, shape index: {}]
  %s3 = inlined_call_operand.vmem [shape: bf16[128,512], index: 3, kind: input, shape index: {}]
  %s4 = inlined_call_operand.vmem [shape: bf16[128,512], index: 4, kind: input, shape index: {}]
  %s5 = inlined_call_operand.vmem [shape: f32[1,512], index: 5, kind: input, shape index: {}]
  %s6 = inlined_call_operand.vmem [shape: bf16[8,8,128], index: 6, kind: output, shape index: {0}]
  %s7 = inlined_call_operand.vmem [shape: f32[8,256], index: 7, kind: output, shape index: {1}]
  %8 = xla_tuple %s6, %s7
  %s9 = sld [smem:[#allocation0]]
  $region61: #{rnn_forward.1} parent=0
    _
  %s11 = ssub.s32 1, %s9
  %s12 = scalar_select 0, %s11, %s9
  %13 = sst [smem:[#allocation6]] %s0
  // Predicated region
  $region2: #{rnn_forward.1} parent=0 // pred_check
    _
  $region3: #{rnn_forward.1} parent=0 // pred_check_branch
    %15 = sbr.rel (0) target = $region5
  $region4: #{rnn_forward.1} parent=0 // pred_region
    _
  $region5: #{rnn_forward.1} parent=0 // pred_fallthru
    _
  // Predicated region
  $region6: #{rnn_forward.1} parent=0 // pred_check
    _
  $region7: #{rnn_forward.1} parent=0 // pred_check_branch
    %17 = sbr.rel (0) target = $region9
  $region8: #{rnn_forward.1} parent=0 // pred_region
    _
  $region9: #{rnn_forward.1} parent=0 // pred_fallthru
    _
  // Predicated region
  $region10: #{rnn_forward.1} parent=0 // pred_check
    _
  $region11: #{rnn_forward.1} parent=0 // pred_check_branch
    %19 = sbr.rel (0) target = $region13
  $region12: #{rnn_forward.1} parent=0 // pred_region
    _
  $region13: #{rnn_forward.1} parent=0 // pred_fallthru
    _
  // Predicated region
  $region14: #{rnn_forward.1} parent=0 // pred_check
    _
  $region15: #{rnn_forward.1} parent=0 // pred_check_branch
    %21 = sbr.rel (0) target = $region17
  $region16: #{rnn_forward.1} parent=0 // pred_region
    _
  $region17: #{rnn_forward.1} parent=0 // pred_fallthru
    _
  // Predicated region
  $region18: #{rnn_forward.1} parent=0 // pred_check
    _
  $region19: #{rnn_forward.1} parent=0 // pred_check_branch
    %23 = sbr.rel (0) target = $region21
  $region20: #{rnn_forward.1} parent=0 // pred_region
    _
  $region21: #{rnn_forward.1} parent=0 // pred_fallthru
    _
  %s25 = sadd.s32 0, 0
  %s26 = smul.u32 %s25, 128
  %s27 = sadd.s32 %s26, 0
  %s28 = sld [smem:[#allocation6 + %s27]]
  %p29 = scmp.eq.s32.totalorder 0, 0
  // Predicated region
  $region22: #{rnn_forward.1} parent=0 // pred_check
    %p30 = pneg %p29
  $region23: #{rnn_forward.1} parent=0 // pred_check_branch
    %32 = sbr.rel (%p30) target = $region25
  $region24: #{rnn_forward.1} parent=0 // pred_region
    %33 = vst [vmem:[#allocation3] sm:$0xff] 0.0
    %34 = vst [vmem:[#allocation4] sm:$0xff] 0.0
  $region25: #{rnn_forward.1} parent=0 // pred_fallthru
    _
  %p35 = scmp.lt.s32.totalorder %s28, 8
  // Predicated region
  $region26: #{rnn_forward.1} parent=0 // pred_check
    %p36 = pneg %p35
  $region27: #{rnn_forward.1} parent=0 // pred_check_branch
    %38 = sbr.rel (%p36) target = $region29
  $region28: #{rnn_forward.1} parent=0 // pred_region
    %39 = vst [vmem:[%s6] sm:$0xf] 0
    %40 = vst [vmem:[%s6 + $0x4] sm:$0xf] 0
    %41 = vst [vmem:[%s6 + $0x8] sm:$0xf] 0
    %42 = vst [vmem:[%s6 + $0xc] sm:$0xf] 0
    %43 = vst [vmem:[%s6 + $0x10] sm:$0xf] 0
    %44 = vst [vmem:[%s6 + $0x14] sm:$0xf] 0
    %45 = vst [vmem:[%s6 + $0x18] sm:$0xf] 0
    %46 = vst [vmem:[%s6 + $0x1c] sm:$0xf] 0
  $region29: #{rnn_forward.1} parent=0 // pred_fallthru
    _
  %p47 = scmp.gt.s32.totalorder %s28, 0
  // Predicated region
  $region30: #{rnn_forward.1} parent=0 // pred_check
    %p48 = pneg %p47
  $region31: #{rnn_forward.1} parent=0 // pred_check_branch
    %50 = sbr.rel (%p48) target = $region33
  $region32: #{rnn_forward.1} parent=0 // pred_region
    %v51 = vld [vmem:[%s2] sm:$0xf]
    %v52 = vld [vmem:[%s2 + $0x4] sm:$0xf]
    %v53 = vld [vmem:[%s2 + $0x8] sm:$0xf]
    %v54 = vld [vmem:[%s2 + $0xc] sm:$0xf]
    %v55 = vld [vmem:[%s2 + $0x10] sm:$0xf]
    %v56 = vld [vmem:[%s2 + $0x14] sm:$0xf]
    %v57 = vld [vmem:[%s2 + $0x18] sm:$0xf]
    %v58 = vld [vmem:[%s2 + $0x1c] sm:$0xf]
    %v59 = vld [vmem:[%s3] sm:$0xff]
    %v60 = vld [vmem:[%s3 + $0x8] sm:$0xff]
    %v61 = vld [vmem:[%s3 + $0x10] sm:$0xff]
    %v62 = vld [vmem:[%s3 + $0x18] sm:$0xff]
    %v63 = vld [vmem:[%s3 + $0x20] sm:$0xff]
    %v64 = vld [vmem:[%s3 + $0x28] sm:$0xff]
    %v65 = vld [vmem:[%s3 + $0x30] sm:$0xff]
    %v66 = vld [vmem:[%s3 + $0x38] sm:$0xff]
    %v67 = vld [vmem:[%s3 + $0x40] sm:$0xff]
    %v68 = vld [vmem:[%s3 + $0x48] sm:$0xff]
    %v69 = vld [vmem:[%s3 + $0x50] sm:$0xff]
    %v70 = vld [vmem:[%s3 + $0x58] sm:$0xff]
    %v71 = vld [vmem:[%s3 + $0x60] sm:$0xff]
    %v72 = vld [vmem:[%s3 + $0x68] sm:$0xff]
    %v73 = vld [vmem:[%s3 + $0x70] sm:$0xff]
    %v74 = vld [vmem:[%s3 + $0x78] sm:$0xff]
    %v75 = vld [vmem:[%s3 + $0x80] sm:$0xff]
    %v76 = vld [vmem:[%s3 + $0x88] sm:$0xff]
    %v77 = vld [vmem:[%s3 + $0x90] sm:$0xff]
    %v78 = vld [vmem:[%s3 + $0x98] sm:$0xff]
    %v79 = vld [vmem:[%s3 + $0xa0] sm:$0xff]
    %v80 = vld [vmem:[%s3 + $0xa8] sm:$0xff]
    %v81 = vld [vmem:[%s3 + $0xb0] sm:$0xff]
    %v82 = vld [vmem:[%s3 + $0xb8] sm:$0xff]
    %v83 = vld [vmem:[%s3 + $0xc0] sm:$0xff]
    %v84 = vld [vmem:[%s3 + $0xc8] sm:$0xff]
    %v85 = vld [vmem:[%s3 + $0xd0] sm:$0xff]
    %v86 = vld [vmem:[%s3 + $0xd8] sm:$0xff]
    %v87 = vld [vmem:[%s3 + $0xe0] sm:$0xff]
    %v88 = vld [vmem:[%s3 + $0xe8] sm:$0xff]
    %v89 = vld [vmem:[%s3 + $0xf0] sm:$0xff]
    %v90 = vld [vmem:[%s3 + $0xf8] sm:$0xff]
    %v91 = vld [vmem:[%s5] sm:$0xf]
    %v93 = vperm.slane %v91, 0
    %v94 = vperm.slane %v91, 1
    %v95 = vperm.slane %v91, 2
    %v96 = vperm.slane %v91, 3
    %v109 = vunpack.c.l.b16 %v51
    %v110 = vunpack.c.l.b16 %v52
    %v111 = vunpack.c.l.b16 %v53
    %v112 = vunpack.c.l.b16 %v54
    %v113 = vunpack.c.l.b16 %v55
    %v114 = vunpack.c.l.b16 %v56
    %v115 = vunpack.c.l.b16 %v57
    %v116 = vunpack.c.l.b16 %v58
    %v117 = vpack.c.b16 %v110, %v109
    %v118 = vpack.c.b16 %v112, %v111
    %v119 = vpack.c.b16 %v114, %v113
    %v120 = vpack.c.b16 %v116, %v115
    %v157 = vunpack.c.l.b16 %v59
    %v158 = vunpack.c.h.b16 %v59
    %v159 = vunpack.c.l.b16 %v60
    %v160 = vunpack.c.h.b16 %v60
    %v161 = vunpack.c.l.b16 %v61
    %v162 = vunpack.c.h.b16 %v61
    %v163 = vunpack.c.l.b16 %v62
    %v164 = vunpack.c.h.b16 %v62
    %v165 = vunpack.c.l.b16 %v63
    %v166 = vunpack.c.h.b16 %v63
    %v167 = vunpack.c.l.b16 %v64
    %v168 = vunpack.c.h.b16 %v64
    %v169 = vunpack.c.l.b16 %v65
    %v170 = vunpack.c.h.b16 %v65
    %v171 = vunpack.c.l.b16 %v66
    %v172 = vunpack.c.h.b16 %v66
    %v173 = vunpack.c.l.b16 %v67
    %v174 = vunpack.c.h.b16 %v67
    %v175 = vunpack.c.l.b16 %v68
    %v176 = vunpack.c.h.b16 %v68
    %v177 = vunpack.c.l.b16 %v69
    %v178 = vunpack.c.h.b16 %v69
    %v179 = vunpack.c.l.b16 %v70
    %v180 = vunpack.c.h.b16 %v70
    %v181 = vunpack.c.l.b16 %v71
    %v182 = vunpack.c.h.b16 %v71
    %v183 = vunpack.c.l.b16 %v72
    %v184 = vunpack.c.h.b16 %v72
    %v185 = vunpack.c.l.b16 %v73
    %v186 = vunpack.c.h.b16 %v73
    %v187 = vunpack.c.l.b16 %v74
    %v188 = vunpack.c.h.b16 %v74
    %v189 = vunpack.c.l.b16 %v75
    %v190 = vunpack.c.h.b16 %v75
    %v191 = vunpack.c.l.b16 %v76
    %v192 = vunpack.c.h.b16 %v76
    %v193 = vunpack.c.l.b16 %v77
    %v194 = vunpack.c.h.b16 %v77
    %v195 = vunpack.c.l.b16 %v78
    %v196 = vunpack.c.h.b16 %v78
    %v197 = vunpack.c.l.b16 %v79
    %v198 = vunpack.c.h.b16 %v79
    %v199 = vunpack.c.l.b16 %v80
    %v200 = vunpack.c.h.b16 %v80
    %v201 = vunpack.c.l.b16 %v81
    %v202 = vunpack.c.h.b16 %v81
    %v203 = vunpack.c.l.b16 %v82
    %v204 = vunpack.c.h.b16 %v82
    %v205 = vunpack.c.l.b16 %v83
    %v206 = vunpack.c.h.b16 %v83
    %v207 = vunpack.c.l.b16 %v84
    %v208 = vunpack.c.h.b16 %v84
    %v209 = vunpack.c.l.b16 %v85
    %v210 = vunpack.c.h.b16 %v85
    %v211 = vunpack.c.l.b16 %v86
    %v212 = vunpack.c.h.b16 %v86
    %v213 = vunpack.c.l.b16 %v87
    %v214 = vunpack.c.h.b16 %v87
    %v215 = vunpack.c.l.b16 %v88
    %v216 = vunpack.c.h.b16 %v88
    %v217 = vunpack.c.l.b16 %v89
    %v218 = vunpack.c.h.b16 %v89
    %v219 = vunpack.c.l.b16 %v90
    %v220 = vunpack.c.h.b16 %v90
    %v221 = vpack.c.b16 %v161, %v157
    %v222 = vpack.c.b16 %v162, %v158
    %v223 = vpack.c.b16 %v163, %v159
    %v224 = vpack.c.b16 %v164, %v160
    %v225 = vpack.c.b16 %v169, %v165
    %v226 = vpack.c.b16 %v170, %v166
    %v227 = vpack.c.b16 %v171, %v167
    %v228 = vpack.c.b16 %v172, %v168
    %v229 = vpack.c.b16 %v177, %v173
    %v230 = vpack.c.b16 %v178, %v174
    %v231 = vpack.c.b16 %v179, %v175
    %v232 = vpack.c.b16 %v180, %v176
    %v233 = vpack.c.b16 %v185, %v181
    %v234 = vpack.c.b16 %v186, %v182
    %v235 = vpack.c.b16 %v187, %v183
    %v236 = vpack.c.b16 %v188, %v184
    %v237 = vpack.c.b16 %v193, %v189
    %v238 = vpack.c.b16 %v194, %v190
    %v239 = vpack.c.b16 %v195, %v191
    %v240 = vpack.c.b16 %v196, %v192
    %v241 = vpack.c.b16 %v201, %v197
    %v242 = vpack.c.b16 %v202, %v198
    %v243 = vpack.c.b16 %v203, %v199
    %v244 = vpack.c.b16 %v204, %v200
    %v245 = vpack.c.b16 %v209, %v205
    %v246 = vpack.c.b16 %v210, %v206
    %v247 = vpack.c.b16 %v211, %v207
    %v248 = vpack.c.b16 %v212, %v208
    %v249 = vpack.c.b16 %v217, %v213
    %v250 = vpack.c.b16 %v218, %v214
    %v251 = vpack.c.b16 %v219, %v215
    %v252 = vpack.c.b16 %v220, %v216
    %285 = vmatpush.bf16.msra.mxu0 %v249
    %286 = vmatpush.bf16.msra.mxu0 %v245
    %287 = vmatpush.bf16.msra.mxu0 %v241
    %288 = vmatpush.bf16.msra.mxu0 %v237
    %289 = vmatpush.bf16.msra.mxu0 %v233
    %290 = vmatpush.bf16.msra.mxu0 %v229
    %291 = vmatpush.bf16.msra.mxu0 %v225
    %292 = vmatpush.bf16.msra.mxu0 %v221
    %293 = vmatmul.bf16.gmra.mxu0 %v117
    %v294 = vpop.f32.mrf.mxu0
    %v295 = vadd.f32 %v93, %v294
    %v296 = vpop.f32.mrf.mxu0
    %v297 = vadd.f32 %v93, %v296
    %298 = vmatmul.bf16.gmra.mxu0 %v118
    %v299 = vpop.f32.mrf.mxu0
    %v300 = vadd.f32 %v93, %v299
    %v301 = vpop.f32.mrf.mxu0
    %v302 = vadd.f32 %v93, %v301
    %303 = vmatmul.bf16.gmra.mxu0 %v119
    %v304 = vpop.f32.mrf.mxu0
    %v305 = vadd.f32 %v93, %v304
    %v306 = vpop.f32.mrf.mxu0
    %v307 = vadd.f32 %v93, %v306
    %308 = vmatmul.bf16.gmra.mxu0 %v120
    %v309 = vpop.f32.mrf.mxu0
    %v310 = vadd.f32 %v93, %v309
    %v311 = vpop.f32.mrf.mxu0
    %v312 = vadd.f32 %v93, %v311
    %313 = vdwg.mxu0
    %314 = vmatpush.bf16.msra.mxu0 %v250
    %315 = vmatpush.bf16.msra.mxu0 %v246
    %316 = vmatpush.bf16.msra.mxu0 %v242
    %317 = vmatpush.bf16.msra.mxu0 %v238
    %318 = vmatpush.bf16.msra.mxu0 %v234
    %319 = vmatpush.bf16.msra.mxu0 %v230
    %320 = vmatpush.bf16.msra.mxu0 %v226
    %321 = vmatpush.bf16.msra.mxu0 %v222
    %322 = vmatmul.bf16.gmra.mxu0 %v117
    %v323 = vpop.f32.mrf.mxu0
    %v324 = vadd.f32 %v94, %v323
    %v325 = vpop.f32.mrf.mxu0
    %v326 = vadd.f32 %v94, %v325
    %327 = vmatmul.bf16.gmra.mxu0 %v118
    %v328 = vpop.f32.mrf.mxu0
    %v329 = vadd.f32 %v94, %v328
    %v330 = vpop.f32.mrf.mxu0
    %v331 = vadd.f32 %v94, %v330
    %332 = vmatmul.bf16.gmra.mxu0 %v119
    %v333 = vpop.f32.mrf.mxu0
    %v334 = vadd.f32 %v94, %v333
    %v335 = vpop.f32.mrf.mxu0
    %v336 = vadd.f32 %v94, %v335
    %337 = vmatmul.bf16.gmra.mxu0 %v120
    %v338 = vpop.f32.mrf.mxu0
    %v339 = vadd.f32 %v94, %v338
    %v340 = vpop.f32.mrf.mxu0
    %v341 = vadd.f32 %v94, %v340
    %342 = vdwg.mxu0
    %343 = vmatpush.bf16.msra.mxu0 %v251
    %344 = vmatpush.bf16.msra.mxu0 %v247
    %345 = vmatpush.bf16.msra.mxu0 %v243
    %346 = vmatpush.bf16.msra.mxu0 %v239
    %347 = vmatpush.bf16.msra.mxu0 %v235
    %348 = vmatpush.bf16.msra.mxu0 %v231
    %349 = vmatpush.bf16.msra.mxu0 %v227
    %350 = vmatpush.bf16.msra.mxu0 %v223
    %351 = vmatmul.bf16.gmra.mxu0 %v117
    %v352 = vpop.f32.mrf.mxu0
    %v353 = vadd.f32 %v95, %v352
    %v354 = vpop.f32.mrf.mxu0
    %v355 = vadd.f32 %v95, %v354
    %356 = vmatmul.bf16.gmra.mxu0 %v118
    %v357 = vpop.f32.mrf.mxu0
    %v358 = vadd.f32 %v95, %v357
    %v359 = vpop.f32.mrf.mxu0
    %v360 = vadd.f32 %v95, %v359
    %361 = vmatmul.bf16.gmra.mxu0 %v119
    %v362 = vpop.f32.mrf.mxu0
    %v363 = vadd.f32 %v95, %v362
    %v364 = vpop.f32.mrf.mxu0
    %v365 = vadd.f32 %v95, %v364
    %366 = vmatmul.bf16.gmra.mxu0 %v120
    %v367 = vpop.f32.mrf.mxu0
    %v368 = vadd.f32 %v95, %v367
    %v369 = vpop.f32.mrf.mxu0
    %v370 = vadd.f32 %v95, %v369
    %371 = vdwg.mxu0
    %372 = vmatpush.bf16.msra.mxu0 %v252
    %373 = vmatpush.bf16.msra.mxu0 %v248
    %374 = vmatpush.bf16.msra.mxu0 %v244
    %375 = vmatpush.bf16.msra.mxu0 %v240
    %376 = vmatpush.bf16.msra.mxu0 %v236
    %377 = vmatpush.bf16.msra.mxu0 %v232
    %378 = vmatpush.bf16.msra.mxu0 %v228
    %379 = vmatpush.bf16.msra.mxu0 %v224
    %380 = vmatmul.bf16.gmra.mxu0 %v117
    %v381 = vpop.f32.mrf.mxu0
    %v382 = vadd.f32 %v96, %v381
    %v383 = vpop.f32.mrf.mxu0
    %v384 = vadd.f32 %v96, %v383
    %385 = vmatmul.bf16.gmra.mxu0 %v118
    %v386 = vpop.f32.mrf.mxu0
    %v387 = vadd.f32 %v96, %v386
    %v388 = vpop.f32.mrf.mxu0
    %v389 = vadd.f32 %v96, %v388
    %390 = vmatmul.bf16.gmra.mxu0 %v119
    %v391 = vpop.f32.mrf.mxu0
    %v392 = vadd.f32 %v96, %v391
    %v393 = vpop.f32.mrf.mxu0
    %v394 = vadd.f32 %v96, %v393
    %395 = vmatmul.bf16.gmra.mxu0 %v120
    %v396 = vpop.f32.mrf.mxu0
    %v397 = vadd.f32 %v96, %v396
    %v398 = vpop.f32.mrf.mxu0
    %v399 = vadd.f32 %v96, %v398
    %400 = vdwg.mxu0
    %v401 = vpack.c.bf16 %v324, %v295
    %v402 = vpack.c.bf16 %v382, %v353
    %v403 = vpack.c.bf16 %v326, %v297
    %v404 = vpack.c.bf16 %v384, %v355
    %v405 = vpack.c.bf16 %v329, %v300
    %v406 = vpack.c.bf16 %v387, %v358
    %v407 = vpack.c.bf16 %v331, %v302
    %v408 = vpack.c.bf16 %v389, %v360
    %v409 = vpack.c.bf16 %v334, %v305
    %v410 = vpack.c.bf16 %v392, %v363
    %v411 = vpack.c.bf16 %v336, %v307
    %v412 = vpack.c.bf16 %v394, %v365
    %v413 = vpack.c.bf16 %v339, %v310
    %v414 = vpack.c.bf16 %v397, %v368
    %v415 = vpack.c.bf16 %v341, %v312
    %v416 = vpack.c.bf16 %v399, %v370
    %417 = vst [vmem:[#allocation2] sm:$0xff] %v401
    %418 = vst [vmem:[#allocation2 + $0x8] sm:$0xff] %v402
    %419 = vst [vmem:[#allocation2 + $0x10] sm:$0xff] %v403
    %420 = vst [vmem:[#allocation2 + $0x18] sm:$0xff] %v404
    %421 = vst [vmem:[#allocation2 + $0x20] sm:$0xff] %v405
    %422 = vst [vmem:[#allocation2 + $0x28] sm:$0xff] %v406
    %423 = vst [vmem:[#allocation2 + $0x30] sm:$0xff] %v407
    %424 = vst [vmem:[#allocation2 + $0x38] sm:$0xff] %v408
    %425 = vst [vmem:[#allocation2 + $0x40] sm:$0xff] %v409
    %426 = vst [vmem:[#allocation2 + $0x48] sm:$0xff] %v410
    %427 = vst [vmem:[#allocation2 + $0x50] sm:$0xff] %v411
    %428 = vst [vmem:[#allocation2 + $0x58] sm:$0xff] %v412
    %429 = vst [vmem:[#allocation2 + $0x60] sm:$0xff] %v413
    %430 = vst [vmem:[#allocation2 + $0x68] sm:$0xff] %v414
    %431 = vst [vmem:[#allocation2 + $0x70] sm:$0xff] %v415
    %432 = vst [vmem:[#allocation2 + $0x78] sm:$0xff] %v416
    %v433 = vld [vmem:[%s1] sm:$0xff]
    %s434 = smul.u32 0, 8
    // While loop
    $region34: #{rnn_forward.1} parent=32 // loop_pre_header
      _
    $region35: #{rnn_forward.1} parent=32 // loop_header
      %s436 = sphi 0, %s438
      %p437 = scmp.ge.s32.totalorder %s436, %s28
    $region36: #{rnn_forward.1} parent=32 // loop_header_branch
      %440 = sbr.rel (%p437) target = $region40
    $region37: #{rnn_forward.1} parent=32 // loop_body
      %v441 = vld [vmem:[#allocation3] sm:$0xff]
      %v442 = vld [vmem:[#allocation4] sm:$0xff]
      %s443 = smul.u32 %s436, 4
      %s444 = smul.addr %s443, 4
      %s445 = scalar_lea.vmem [#allocation2], %s444
      %v446 = vld [vmem:[%s445] sm:$0xff]
      %v447 = vld [vmem:[%s445 + $0x8] sm:$0xff]
      %v448 = vunpack.c.l.bf16 %v446
      %v449 = vunpack.c.h.bf16 %v446
      %v450 = vunpack.c.l.bf16 %v447
      %v451 = vunpack.c.h.bf16 %v447
      %v452 = vpack.c.bf16 %v441, %v441
      %v453 = vld [vmem:[%s4] sm:$0xff]
      %v454 = vld [vmem:[%s4 + $0x8] sm:$0xff]
      %v455 = vld [vmem:[%s4 + $0x10] sm:$0xff]
      %v456 = vld [vmem:[%s4 + $0x18] sm:$0xff]
      %v457 = vld [vmem:[%s4 + $0x20] sm:$0xff]
      %v458 = vld [vmem:[%s4 + $0x28] sm:$0xff]
      %v459 = vld [vmem:[%s4 + $0x30] sm:$0xff]
      %v460 = vld [vmem:[%s4 + $0x38] sm:$0xff]
      %v461 = vld [vmem:[%s4 + $0x40] sm:$0xff]
      %v462 = vld [vmem:[%s4 + $0x48] sm:$0xff]
      %v463 = vld [vmem:[%s4 + $0x50] sm:$0xff]
      %v464 = vld [vmem:[%s4 + $0x58] sm:$0xff]
      %v465 = vld [vmem:[%s4 + $0x60] sm:$0xff]
      %v466 = vld [vmem:[%s4 + $0x68] sm:$0xff]
      %v467 = vld [vmem:[%s4 + $0x70] sm:$0xff]
      %v468 = vld [vmem:[%s4 + $0x78] sm:$0xff]
      %v469 = vld [vmem:[%s4 + $0x80] sm:$0xff]
      %v470 = vld [vmem:[%s4 + $0x88] sm:$0xff]
      %v471 = vld [vmem:[%s4 + $0x90] sm:$0xff]
      %v472 = vld [vmem:[%s4 + $0x98] sm:$0xff]
      %v473 = vld [vmem:[%s4 + $0xa0] sm:$0xff]
      %v474 = vld [vmem:[%s4 + $0xa8] sm:$0xff]
      %v475 = vld [vmem:[%s4 + $0xb0] sm:$0xff]
      %v476 = vld [vmem:[%s4 + $0xb8] sm:$0xff]
      %v477 = vld [vmem:[%s4 + $0xc0] sm:$0xff]
      %v478 = vld [vmem:[%s4 + $0xc8] sm:$0xff]
      %v479 = vld [vmem:[%s4 + $0xd0] sm:$0xff]
      %v480 = vld [vmem:[%s4 + $0xd8] sm:$0xff]
      %v481 = vld [vmem:[%s4 + $0xe0] sm:$0xff]
      %v482 = vld [vmem:[%s4 + $0xe8] sm:$0xff]
      %v483 = vld [vmem:[%s4 + $0xf0] sm:$0xff]
      %v484 = vld [vmem:[%s4 + $0xf8] sm:$0xff]
      %v517 = vunpack.c.l.b16 %v453
      %v518 = vunpack.c.h.b16 %v453
      %v519 = vunpack.c.l.b16 %v454
      %v520 = vunpack.c.h.b16 %v454
      %v521 = vunpack.c.l.b16 %v455
      %v522 = vunpack.c.h.b16 %v455
      %v523 = vunpack.c.l.b16 %v456
      %v524 = vunpack.c.h.b16 %v456
      %v525 = vunpack.c.l.b16 %v457
      %v526 = vunpack.c.h.b16 %v457
      %v527 = vunpack.c.l.b16 %v458
      %v528 = vunpack.c.h.b16 %v458
      %v529 = vunpack.c.l.b16 %v459
      %v530 = vunpack.c.h.b16 %v459
      %v531 = vunpack.c.l.b16 %v460
      %v532 = vunpack.c.h.b16 %v460
      %v533 = vunpack.c.l.b16 %v461
      %v534 = vunpack.c.h.b16 %v461
      %v535 = vunpack.c.l.b16 %v462
      %v536 = vunpack.c.h.b16 %v462
      %v537 = vunpack.c.l.b16 %v463
      %v538 = vunpack.c.h.b16 %v463
      %v539 = vunpack.c.l.b16 %v464
      %v540 = vunpack.c.h.b16 %v464
      %v541 = vunpack.c.l.b16 %v465
      %v542 = vunpack.c.h.b16 %v465
      %v543 = vunpack.c.l.b16 %v466
      %v544 = vunpack.c.h.b16 %v466
      %v545 = vunpack.c.l.b16 %v467
      %v546 = vunpack.c.h.b16 %v467
      %v547 = vunpack.c.l.b16 %v468
      %v548 = vunpack.c.h.b16 %v468
      %v549 = vunpack.c.l.b16 %v469
      %v550 = vunpack.c.h.b16 %v469
      %v551 = vunpack.c.l.b16 %v470
      %v552 = vunpack.c.h.b16 %v470
      %v553 = vunpack.c.l.b16 %v471
      %v554 = vunpack.c.h.b16 %v471
      %v555 = vunpack.c.l.b16 %v472
      %v556 = vunpack.c.h.b16 %v472
      %v557 = vunpack.c.l.b16 %v473
      %v558 = vunpack.c.h.b16 %v473
      %v559 = vunpack.c.l.b16 %v474
      %v560 = vunpack.c.h.b16 %v474
      %v561 = vunpack.c.l.b16 %v475
      %v562 = vunpack.c.h.b16 %v475
      %v563 = vunpack.c.l.b16 %v476
      %v564 = vunpack.c.h.b16 %v476
      %v565 = vunpack.c.l.b16 %v477
      %v566 = vunpack.c.h.b16 %v477
      %v567 = vunpack.c.l.b16 %v478
      %v568 = vunpack.c.h.b16 %v478
      %v569 = vunpack.c.l.b16 %v479
      %v570 = vunpack.c.h.b16 %v479
      %v571 = vunpack.c.l.b16 %v480
      %v572 = vunpack.c.h.b16 %v480
      %v573 = vunpack.c.l.b16 %v481
      %v574 = vunpack.c.h.b16 %v481
      %v575 = vunpack.c.l.b16 %v482
      %v576 = vunpack.c.h.b16 %v482
      %v577 = vunpack.c.l.b16 %v483
      %v578 = vunpack.c.h.b16 %v483
      %v579 = vunpack.c.l.b16 %v484
      %v580 = vunpack.c.h.b16 %v484
      %v581 = vpack.c.b16 %v521, %v517
      %v582 = vpack.c.b16 %v522, %v518
      %v583 = vpack.c.b16 %v523, %v519
      %v584 = vpack.c.b16 %v524, %v520
      %v585 = vpack.c.b16 %v529, %v525
      %v586 = vpack.c.b16 %v530, %v526
      %v587 = vpack.c.b16 %v531, %v527
      %v588 = vpack.c.b16 %v532, %v528
      %v589 = vpack.c.b16 %v537, %v533
      %v590 = vpack.c.b16 %v538, %v534
      %v591 = vpack.c.b16 %v539, %v535
      %v592 = vpack.c.b16 %v540, %v536
      %v593 = vpack.c.b16 %v545, %v541
      %v594 = vpack.c.b16 %v546, %v542
      %v595 = vpack.c.b16 %v547, %v543
      %v596 = vpack.c.b16 %v548, %v544
      %v597 = vpack.c.b16 %v553, %v549
      %v598 = vpack.c.b16 %v554, %v550
      %v599 = vpack.c.b16 %v555, %v551
      %v600 = vpack.c.b16 %v556, %v552
      %v601 = vpack.c.b16 %v561, %v557
      %v602 = vpack.c.b16 %v562, %v558
      %v603 = vpack.c.b16 %v563, %v559
      %v604 = vpack.c.b16 %v564, %v560
      %v605 = vpack.c.b16 %v569, %v565
      %v606 = vpack.c.b16 %v570, %v566
      %v607 = vpack.c.b16 %v571, %v567
      %v608 = vpack.c.b16 %v572, %v568
      %v609 = vpack.c.b16 %v577, %v573
      %v610 = vpack.c.b16 %v578, %v574
      %v611 = vpack.c.b16 %v579, %v575
      %v612 = vpack.c.b16 %v580, %v576
      %645 = vmatpush.bf16.msra.mxu0 %v609
      %646 = vmatpush.bf16.msra.mxu0 %v605
      %647 = vmatpush.bf16.msra.mxu0 %v601
      %648 = vmatpush.bf16.msra.mxu0 %v597
      %649 = vmatpush.bf16.msra.mxu0 %v593
      %650 = vmatpush.bf16.msra.mxu0 %v589
      %651 = vmatpush.bf16.msra.mxu0 %v585
      %652 = vmatpush.bf16.msra.mxu0 %v581
      %653 = vmatmul.bf16.gmra.mxu0 %v452
      %v654 = vpop.f32.mrf.mxu0
      %v655 = vadd.f32 0.0, %v654
      %v656 = vpop.f32.mrf.mxu0
      %657 = vdwg.mxu0
      %658 = vmatpush.bf16.msra.mxu0 %v610
      %659 = vmatpush.bf16.msra.mxu0 %v606
      %660 = vmatpush.bf16.msra.mxu0 %v602
      %661 = vmatpush.bf16.msra.mxu0 %v598
      %662 = vmatpush.bf16.msra.mxu0 %v594
      %663 = vmatpush.bf16.msra.mxu0 %v590
      %664 = vmatpush.bf16.msra.mxu0 %v586
      %665 = vmatpush.bf16.msra.mxu0 %v582
      %666 = vmatmul.bf16.gmra.mxu0 %v452
      %v667 = vpop.f32.mrf.mxu0
      %v668 = vadd.f32 0.0, %v667
      %v669 = vpop.f32.mrf.mxu0
      %670 = vdwg.mxu0
      %671 = vmatpush.bf16.msra.mxu0 %v611
      %672 = vmatpush.bf16.msra.mxu0 %v607
      %673 = vmatpush.bf16.msra.mxu0 %v603
      %674 = vmatpush.bf16.msra.mxu0 %v599
      %675 = vmatpush.bf16.msra.mxu0 %v595
      %676 = vmatpush.bf16.msra.mxu0 %v591
      %677 = vmatpush.bf16.msra.mxu0 %v587
      %678 = vmatpush.bf16.msra.mxu0 %v583
      %679 = vmatmul.bf16.gmra.mxu0 %v452
      %v680 = vpop.f32.mrf.mxu0
      %v681 = vadd.f32 0.0, %v680
      %v682 = vpop.f32.mrf.mxu0
      %683 = vdwg.mxu0
      %684 = vmatpush.bf16.msra.mxu0 %v612
      %685 = vmatpush.bf16.msra.mxu0 %v608
      %686 = vmatpush.bf16.msra.mxu0 %v604
      %687 = vmatpush.bf16.msra.mxu0 %v600
      %688 = vmatpush.bf16.msra.mxu0 %v596
      %689 = vmatpush.bf16.msra.mxu0 %v592
      %690 = vmatpush.bf16.msra.mxu0 %v588
      %691 = vmatpush.bf16.msra.mxu0 %v584
      %692 = vmatmul.bf16.gmra.mxu0 %v452
      %v693 = vpop.f32.mrf.mxu0
      %v694 = vadd.f32 0.0, %v693
      %v695 = vpop.f32.mrf.mxu0
      %696 = vdwg.mxu0
      %v697 = vadd.f32 %v448, %v655
      %v698 = vadd.f32 %v449, %v668
      %v699 = vadd.f32 %v450, %v681
      %v700 = vadd.f32 %v451, %v694
      %v701 = vmul.f32 %v697, 0.5
      %v702 = vtanh.pop %v701
      %v703 = vadd.f32 %v702, 1.0
      %v704 = vmul.f32 %v703, 0.5
      %v705 = vmul.f32 %v698, 0.5
      %v706 = vtanh.pop %v705
      %v707 = vadd.f32 %v706, 1.0
      %v708 = vmul.f32 %v707, 0.5
      %v709 = vtanh.pop %v699
      %v710 = vmul.f32 %v700, 0.5
      %v711 = vtanh.pop %v710
      %v712 = vadd.f32 %v711, 1.0
      %v713 = vmul.f32 %v712, 0.5
      %v714 = vmul.f32 %v708, %v442
      %v715 = vmul.f32 %v704, %v709
      %v716 = vadd.f32 %v714, %v715
      %v717 = vtanh.pop %v716
      %v718 = vmul.f32 %v713, %v717
      %s719 = sadd.s32 %s434, %s436
      %v720 = vstv %s719
      %vm721 = vcmp.lt.s32.totalorder %v720, %v433
      %v722 = vsel %vm721, 1, 0
      %723 = vset.pattern.permute.xlu0 0
      %724 = vperm.xlu0 %723, %v722
      %v725 = vpop.permute.xlu0 %724
      %vm726 = vcmp.eq.s32.totalorder %v725, 1
      %v727 = vsel %vm726, %v718, %v441
      %728 = vst [vmem:[#allocation3] sm:$0xff] %v727
      %v729 = vsel %vm726, %v716, %v442
      %730 = vst [vmem:[#allocation4] sm:$0xff] %v729
      %v731 = vsel %vm726, %v718, 0.0
      %v732 = vpack.c.bf16 %v731, %v731
      %s733 = smul.addr %s436, 4
      %s734 = scalar_lea.vmem %s6, %s733
      %735 = vst [vmem:[%s734] sm:$0xf] %v732
    $region38: #{rnn_forward.1} parent=32 // loop_footer
      %s438 = sadd.s32 %s436, 1
    $region39: #{rnn_forward.1} parent=32 // loop_footer_branch
      %435 = sbr.rel target = $region35
    $region40: #{rnn_forward.1} parent=32 // loop_exit
      _
  $region33: #{rnn_forward.1} parent=0 // pred_fallthru
    _
  // Predicated region
  $region41: #{rnn_forward.1} parent=0 // pred_check
    %p736 = pneg %p29
  $region42: #{rnn_forward.1} parent=0 // pred_check_branch
    %738 = sbr.rel (%p736) target = $region44
  $region43: #{rnn_forward.1} parent=0 // pred_region
    %v739 = vld [vmem:[#allocation3] sm:$0xff]
    %740 = vst [vmem:[%s7] sm:$0xff] %v739
    %v741 = vld [vmem:[#allocation4] sm:$0xff]
    %742 = vst [vmem:[%s7 + $0x8] sm:$0xff] %v741
  $region44: #{rnn_forward.1} parent=0 // pred_fallthru
    _
  // Predicated region
  $region45: #{rnn_forward.1} parent=0 // pred_check
    _
  $region46: #{rnn_forward.1} parent=0 // pred_check_branch
    %744 = sbr.rel (0) target = $region48
  $region47: #{rnn_forward.1} parent=0 // pred_region
    _
  $region48: #{rnn_forward.1} parent=0 // pred_fallthru
    _
  // Predicated region
  $region49: #{rnn_forward.1} parent=0 // pred_check
    _
  $region50: #{rnn_forward.1} parent=0 // pred_check_branch
    %746 = sbr.rel (0) target = $region52
  $region51: #{rnn_forward.1} parent=0 // pred_region
    _
  $region52: #{rnn_forward.1} parent=0 // pred_fallthru
    _
  // Predicated region
  $region53: #{rnn_forward.1} parent=0 // pred_check
    _
  $region54: #{rnn_forward.1} parent=0 // pred_check_branch
    %748 = sbr.rel (0) target = $region56
  $region55: #{rnn_forward.1} parent=0 // pred_region
    _
  $region56: #{rnn_forward.1} parent=0 // pred_fallthru
    _
  // Predicated region
  $region57: #{rnn_forward.1} parent=0 // pred_check
    _
  $region58: #{rnn_forward.1} parent=0 // pred_check_branch
    %750 = sbr.rel (0) target = $region60
  $region59: #{rnn_forward.1} parent=0 // pred_region
    _
  $region60: #{rnn_forward.1} parent=0 // pred_fallthru
    _

</llo_original>
